<compile_context>
chip_gen: v5e
topology: v5e:2x2
jax: 0.10.0
libtpu: 0.0.40
codegen_flags: <defaults>
</compile_context>

<pallas_src>
import functools

import jax
import jax.numpy as jnp
from jax.experimental import pallas as pl
from jax.experimental.pallas import tpu as pltpu


def _round_up(x, m):
    return ((x + m - 1) // m) * m


def predictor_kernel(x_ref, w1_ref, b1_ref, w2_ref, b2_ref, o_ref):
    # First Linear: cat(z, action) @ W1 + b1 as one bf16 MXU matmul, f32 acc.
    h = jnp.dot(x_ref[...], w1_ref[...], preferred_element_type=jnp.float32)
    h = jnp.maximum(h + b1_ref[...], 0.0)          # bias broadcast + ReLU (VPU)
    # Second Linear: h @ W2 + b2 (bf16 MXU inputs, f32 accumulation).  W2/b2
    # were padded to a lane-dense output width at prep time, so this store is
    # an unmasked, full-lane vst.
    out = jnp.dot(h.astype(jnp.bfloat16), w2_ref[...],
                  preferred_element_type=jnp.float32)
    o_ref[...] = (out + b2_ref[...]).astype(o_ref.dtype)


def prepare_params(w1, b1, w2, b2):
    """One-time parameter preparation (NOT per forward call).

    w1: (E + A, H), b1: (H,), w2: (H, E), b2: (E,) in (in, out) layout.
    Casts the matmul weights to bf16 (f32 accumulation preserved in-kernel),
    reshapes biases to 2-D, and zero-pads W2/b2 columns so the kernel's output
    width is a multiple of 128 (lane-dense stores).
    """
    K, H = w1.shape
    H2, E = w2.shape
    assert H == H2, "weight shapes inconsistent"
    n_pad = _round_up(E, 128)
    w2_p = jnp.zeros((H, n_pad), jnp.float32).at[:, :E].set(
        w2.astype(jnp.float32))
    b2_p = jnp.zeros((1, n_pad), jnp.float32).at[:, :E].set(
        b2.reshape(1, E).astype(jnp.float32))
    return {
        "w1": w1.astype(jnp.bfloat16),             # (K, H)      MXU operand
        "b1": b1.reshape(1, H).astype(jnp.float32),  # (1, H)
        "w2": w2_p.astype(jnp.bfloat16),           # (H, n_pad)  MXU operand
        "b2": b2_p,                                # (1, n_pad)  f32
    }


def _pick_block_b(B):
    """Batch tile: single resident block for small B; >=2 grid steps and a
    2048 cap for large B (both v7x TensorCores busy, bounded VMEM)."""
    if B <= 1024:
        return _round_up(B, 8)
    return min(2048, _round_up((B + 1) // 2, 16))


@functools.partial(jax.jit, static_argnames=("block_b",))
def predictor_forward(z, action, params, block_b=None):
    """z: (B, E), action: (B, A); params from prepare_params(). Returns (B, E) f32."""
    B, E = z.shape
    H = params["w1"].shape[1]
    Np = params["w2"].shape[1]                      # padded output width

    # Concatenate once in the wrapper; single bf16 input slab for the kernel.
    x = jnp.concatenate([z, action], axis=-1).astype(jnp.bfloat16)   # (B, K)
    K = x.shape[1]

    if block_b is None:
        block_b = _pick_block_b(B)
    else:
        block_b = max(8, _round_up(min(block_b, _round_up(B, 8)), 8))

    # Never collapse to one giant block: pad B up to a multiple of the tile.
    B_pad = _round_up(B, block_b)
    if B_pad != B:
        x = jnp.pad(x, ((0, B_pad - B), (0, 0)))

    grid = (B_pad // block_b,)
    in_specs = [
        pl.BlockSpec((block_b, K), lambda i: (i, 0)),   # x  (bf16, tiled)
        pl.BlockSpec((K, H), lambda i: (0, 0)),         # w1 (resident)
        pl.BlockSpec((1, H), lambda i: (0, 0)),         # b1 (resident)
        pl.BlockSpec((H, Np), lambda i: (0, 0)),        # w2 (resident)
        pl.BlockSpec((1, Np), lambda i: (0, 0)),        # b2 (resident)
    ]
    out_specs = pl.BlockSpec((block_b, Np), lambda i: (i, 0))

    flops = 2 * B_pad * (K * H + H * Np)
    bytes_accessed = (
        x.size * 2
        + params["w1"].size * 2 + params["b1"].size * 4
        + params["w2"].size * 2 + params["b2"].size * 4
        + B_pad * Np * 4
    )

    out = pl.pallas_call(
        predictor_kernel,
        out_shape=jax.ShapeDtypeStruct((B_pad, Np), jnp.float32),
        grid=grid,
        in_specs=in_specs,
        out_specs=out_specs,
        compiler_params=pltpu.CompilerParams(
            dimension_semantics=("parallel",),
            vmem_limit_bytes=48 * 1024 * 1024),   # headroom for block_b sweeps
        cost_estimate=pl.CostEstimate(
            flops=flops, transcendentals=0, bytes_accessed=bytes_accessed),
    )(x, params["w1"], params["b1"], params["w2"], params["b2"])

    if B_pad != B or Np != E:
        out = out[:B, :E]
    return out


def reference_mirror(z, action, params):
    """Pure-JAX reference mirroring the kernel's bf16 cast points exactly."""
    E = z.shape[1]
    x = jnp.concatenate([z, action], axis=-1).astype(jnp.bfloat16)
    x = x.astype(jnp.float32)
    h = x @ params["w1"].astype(jnp.float32) + params["b1"]
    h = jnp.maximum(h, 0.0).astype(jnp.bfloat16).astype(jnp.float32)
    out = h @ params["w2"].astype(jnp.float32) + params["b2"]
    return out[:, :E]


def reference_f32(z, action, w1, b1, w2, b2):
    """Full-precision reference of the original PyTorch forward."""
    x = jnp.concatenate([z, action], axis=-1)
    h = jnp.maximum(x @ w1 + b1, 0.0)
    return h @ w2 + b2


if __name__ == "__main__":
    # Small, module-consistent shapes: embedding_dim=32, action_dim=2, hidden=256
    B, E, A, H = 8, 32, 2, 256

    key = jax.random.PRNGKey(0)
    kz, ka, k1, k2, k3, k4 = jax.random.split(key, 6)

    z = jax.random.normal(kz, (B, E), dtype=jnp.float32)
    action = jax.random.normal(ka, (B, A), dtype=jnp.float32)

    # Deterministic PyTorch-Linear-style uniform init, (in, out) layout.
    bound1 = 1.0 / jnp.sqrt(E + A)
    w1 = jax.random.uniform(k1, (E + A, H), minval=-bound1, maxval=bound1,
                            dtype=jnp.float32)
    b1 = jax.random.uniform(k2, (H,), minval=-bound1, maxval=bound1,
                            dtype=jnp.float32)
    bound2 = 1.0 / jnp.sqrt(H)
    w2 = jax.random.uniform(k3, (H, E), minval=-bound2, maxval=bound2,
                            dtype=jnp.float32)
    b2 = jax.random.uniform(k4, (E,), minval=-bound2, maxval=bound2,
                            dtype=jnp.float32)

    # One-time parameter prep (hoisted out of the per-call path).
    params = prepare_params(w1, b1, w2, b2)

    out = predictor_forward(z, action, params)
    jax.block_until_ready(out)
    assert out.shape == (B, E)

    # Tight check against a reference that mirrors the kernel's bf16 casts.
    ref_m = reference_mirror(z, action, params)
    assert jnp.allclose(out, ref_m, atol=1e-3, rtol=1e-3), (
        float(jnp.max(jnp.abs(out - ref_m))))

    # Loose check against the full-f32 PyTorch-equivalent forward
    # (difference bounded by bf16 input/activation rounding; accum stays f32).
    ref_f = reference_f32(z, action, w1, b1, w2, b2)
    assert jnp.allclose(out, ref_f, atol=5e-2, rtol=5e-2), (
        float(jnp.max(jnp.abs(out - ref_f))))

    print("KERNEL_OK")
</pallas_src>

<mosaic_0001>
module attributes {stable_mosaic.version = 11 : i64} {
  func.func @predictor_kernel(%arg0: i32, %arg1: memref<8x34xbf16, #tpu.memory_space<vmem>>, %arg2: memref<34x256xbf16, #tpu.memory_space<vmem>>, %arg3: memref<1x256xf32, #tpu.memory_space<vmem>>, %arg4: memref<256x128xbf16, #tpu.memory_space<vmem>>, %arg5: memref<1x128xf32, #tpu.memory_space<vmem>>, %arg6: memref<8x128xf32, #tpu.memory_space<vmem>>) attributes {dimension_semantics = [#tpu.dimension_semantics<parallel>], iteration_bounds = array<i64: 1>, scalar_prefetch = 0 : i64, scratch_operands = 0 : i64, tpu.core_type = #tpu.core_type<tc>, window_params = [{transform_indices = @transform_0, window_bounds = array<i64: 8, 34>}, {pipeline_mode = #tpu.pipeline_mode<synchronous>, transform_indices = @transform_1, window_bounds = array<i64: 34, 256>}, {pipeline_mode = #tpu.pipeline_mode<synchronous>, transform_indices = @transform_2, window_bounds = array<i64: 1, 256>}, {pipeline_mode = #tpu.pipeline_mode<synchronous>, transform_indices = @transform_3, window_bounds = array<i64: 256, 128>}, {pipeline_mode = #tpu.pipeline_mode<synchronous>, transform_indices = @transform_4, window_bounds = array<i64: 1, 128>}, {transform_indices = @transform_5, window_bounds = array<i64: 8, 128>}]} {
    %c0 = arith.constant 0 : index
    %c0_0 = arith.constant 0 : index
    %0 = vector.load %arg1[%c0, %c0_0] : memref<8x34xbf16, #tpu.memory_space<vmem>>, vector<8x34xbf16>
    %c0_1 = arith.constant 0 : index
    %c0_2 = arith.constant 0 : index
    %1 = vector.load %arg2[%c0_1, %c0_2] : memref<34x256xbf16, #tpu.memory_space<vmem>>, vector<34x256xbf16>
    %cst = arith.constant dense<0.000000e+00> : vector<8x256xf32>
    %2 = tpu.matmul %0, %1, %cst {dimension_numbers = #tpu.dot_dimension_numbers<[1], [0], [0], [1], [0, 0, 1, 1], [], []>} : vector<8x34xbf16>, vector<34x256xbf16>, vector<8x256xf32> -> vector<8x256xf32>
    %c0_3 = arith.constant 0 : index
    %c0_4 = arith.constant 0 : index
    %3 = vector.load %arg3[%c0_3, %c0_4] : memref<1x256xf32, #tpu.memory_space<vmem>>, vector<1x256xf32>
    %4 = vector.broadcast %3 : vector<1x256xf32> to vector<8x256xf32>
    %5 = arith.addf %2, %4 : vector<8x256xf32>
    %cst_5 = arith.constant 0.000000e+00 : f32
    %6 = vector.broadcast %cst_5 : f32 to vector<8x256xf32>
    %7 = arith.maximumf %5, %6 : vector<8x256xf32>
    %8 = arith.truncf %7 : vector<8x256xf32> to vector<8x256xbf16>
    %c0_6 = arith.constant 0 : index
    %c0_7 = arith.constant 0 : index
    %9 = vector.load %arg4[%c0_6, %c0_7] : memref<256x128xbf16, #tpu.memory_space<vmem>>, vector<256x128xbf16>
    %cst_8 = arith.constant dense<0.000000e+00> : vector<8x128xf32>
    %10 = tpu.matmul %8, %9, %cst_8 {dimension_numbers = #tpu.dot_dimension_numbers<[1], [0], [0], [1], [0, 0, 1, 1], [], []>} : vector<8x256xbf16>, vector<256x128xbf16>, vector<8x128xf32> -> vector<8x128xf32>
    %c0_9 = arith.constant 0 : index
    %c0_10 = arith.constant 0 : index
    %11 = vector.load %arg5[%c0_9, %c0_10] : memref<1x128xf32, #tpu.memory_space<vmem>>, vector<1x128xf32>
    %12 = vector.broadcast %11 : vector<1x128xf32> to vector<8x128xf32>
    %13 = arith.addf %10, %12 : vector<8x128xf32>
    %c0_11 = arith.constant 0 : index
    %c0_12 = arith.constant 0 : index
    %14 = vector.load %arg6[%c0_11, %c0_12] : memref<8x128xf32, #tpu.memory_space<vmem>>, vector<8x128xf32>
    tpu.vector_store %arg6[%c0_11, %c0_12], %13 {strides = array<i32>} : memref<8x128xf32, #tpu.memory_space<vmem>>, vector<8x128xf32>,
    return
  }
  func.func @transform_0(%arg0: i32) -> (i32, i32) {
    %c0_i32 = arith.constant 0 : i32
    %c0_i32_0 = arith.constant 0 : i32
    return %arg0, %c0_i32 : i32, i32
  }
  func.func @transform_1(%arg0: i32) -> (i32, i32) {
    %c0_i32 = arith.constant 0 : i32
    %c0_i32_0 = arith.constant 0 : i32
    %c0_i32_1 = arith.constant 0 : i32
    return %c0_i32, %c0_i32_0 : i32, i32
  }
  func.func @transform_2(%arg0: i32) -> (i32, i32) {
    %c0_i32 = arith.constant 0 : i32
    %c0_i32_0 = arith.constant 0 : i32
    %c0_i32_1 = arith.constant 0 : i32
    return %c0_i32, %c0_i32_0 : i32, i32
  }
  func.func @transform_3(%arg0: i32) -> (i32, i32) {
    %c0_i32 = arith.constant 0 : i32
    %c0_i32_0 = arith.constant 0 : i32
    %c0_i32_1 = arith.constant 0 : i32
    return %c0_i32, %c0_i32_0 : i32, i32
  }
  func.func @transform_4(%arg0: i32) -> (i32, i32) {
    %c0_i32 = arith.constant 0 : i32
    %c0_i32_0 = arith.constant 0 : i32
    %c0_i32_1 = arith.constant 0 : i32
    return %c0_i32, %c0_i32_0 : i32, i32
  }
  func.func @transform_5(%arg0: i32) -> (i32, i32) {
    %c0_i32 = arith.constant 0 : i32
    %c0_i32_0 = arith.constant 0 : i32
    return %arg0, %c0_i32 : i32, i32
  }
}

</mosaic_0001>

<llo_original>
// kernel: predictor_forward.1
$region0: #{predictor_forward.1}
  #allocation0 [shape = 'u32[]', space=smem, size = 0x4, offset = 0x4, fixed_abs, tag = 'smem constant byte address 0x4 - core index']
  #allocation1 [shape = 'u32[72,128]{1,0:T(1,128)}', space=vmem, size = 0x9000, scoped, tag = 'internal scratch']
  %s0 = inlined_call_operand.vmem [shape: bf16[8,34], index: 0, kind: input, shape index: {}]
  %s1 = inlined_call_operand.hbm [shape: bf16[34,256], index: 1, kind: input, shape index: {}]
  %s2 = inlined_call_operand.vmem [shape: f32[1,256], index: 2, kind: input, shape index: {}]
  %s3 = inlined_call_operand.hbm [shape: bf16[256,128], index: 3, kind: input, shape index: {}]
  %s4 = inlined_call_operand.vmem [shape: f32[1,128], index: 4, kind: input, shape index: {}]
  %s5 = inlined_call_operand.hbm [shape: f32[8,128], index: 5, kind: output, shape index: {}]
  %s6 = sld [smem:[#allocation0]]
  $region38: #{predictor_forward.1} parent=0
    _
  %s8 = ssub.s32 1, %s6
  %s9 = scalar_select 0, %s8, %s6
  $region1: #{predictor_forward.1} parent=0
    #allocation2 [shape = 'u8[20480]{0}', space=vmem, size = 0x5000, scoped, tag = 'input window, operand 1, single buffered']
    #allocation3 [shape = 's32[1]{0}', space=sflag, size = 0x4, scoped, tag = 'scoped memory for predictor_forward.1']
    #allocation4 [shape = 's32[1]{0}', space=sflag, size = 0x4, scoped, tag = 'scoped memory for predictor_forward.1']
    #allocation5 [shape = 'u8[65536]{0}', space=vmem, size = 0x10000, scoped, tag = 'input window, operand 3, single buffered']
    #allocation6 [shape = 's32[1]{0}', space=sflag, size = 0x4, scoped, tag = 'scoped memory for predictor_forward.1']
    #allocation7 [shape = 'u8[4096]{0}', space=vmem, size = 0x1000, scoped, tag = 'output window, operand 0, single buffered']
    %10 = vsyncpa [#allocation3], 0
    %11 = vsyncpa [#allocation6], 0
    %12 = vsyncpa [#allocation4], 0
    // Predicated region
    $region2: #{predictor_forward.1} parent=1 // pred_check
      _
    $region3: #{predictor_forward.1} parent=1 // pred_check_branch
      %14 = sbr.rel (0) target = $region5
    $region4: #{predictor_forward.1} parent=1 // pred_region
      _
    $region5: #{predictor_forward.1} parent=1 // pred_fallthru
      _
    // Predicated region
    $region6: #{predictor_forward.1} parent=1 // pred_check
      _
    $region7: #{predictor_forward.1} parent=1 // pred_check_branch
      %16 = sbr.rel (0) target = $region9
    $region8: #{predictor_forward.1} parent=1 // pred_region
      %18 = vsyncadd [#allocation3], 0
      %s19 = sshll.u32 %s1, 4
      %s20 = int_to_ptr.hbm [resolvable:$true] %s19
      %s21 = sshll.u32 [#allocation2], 4
      %s22 = int_to_ptr.vmem [resolvable:$true] %s21
      %27 = dma.hbm_to_vmem [thread:$0]  %s20, 640, %s22, [#allocation3], 128, 128, 8
    $region9: #{predictor_forward.1} parent=1 // pred_fallthru
      _
    // Predicated region
    $region10: #{predictor_forward.1} parent=1 // pred_check
      _
    $region11: #{predictor_forward.1} parent=1 // pred_check_branch
      %29 = sbr.rel (0) target = $region13
    $region12: #{predictor_forward.1} parent=1 // pred_region
      _
    $region13: #{predictor_forward.1} parent=1 // pred_fallthru
      _
    // Predicated region
    $region14: #{predictor_forward.1} parent=1 // pred_check
      _
    $region15: #{predictor_forward.1} parent=1 // pred_check_branch
      %31 = sbr.rel (0) target = $region17
    $region16: #{predictor_forward.1} parent=1 // pred_region
      %33 = vsyncadd [#allocation6], 0
      %s34 = sshll.u32 %s3, 4
      %s35 = int_to_ptr.hbm [resolvable:$true] %s34
      %s36 = sshll.u32 [#allocation5], 4
      %s37 = int_to_ptr.vmem [resolvable:$true] %s36
      %42 = dma.hbm_to_vmem [thread:$0]  %s35, 2048, %s37, [#allocation6], 64, 64, 4
    $region17: #{predictor_forward.1} parent=1 // pred_fallthru
      _
    // Predicated region
    $region18: #{predictor_forward.1} parent=1 // pred_check
      _
    $region19: #{predictor_forward.1} parent=1 // pred_check_branch
      %44 = sbr.rel (0) target = $region21
    $region20: #{predictor_forward.1} parent=1 // pred_region
      _
    $region21: #{predictor_forward.1} parent=1 // pred_fallthru
      _
    // Predicated region
    $region22: #{predictor_forward.1} parent=1 // pred_check
      _
    $region23: #{predictor_forward.1} parent=1 // pred_check_branch
      %46 = sbr.rel (0) target = $region25
    $region24: #{predictor_forward.1} parent=1 // pred_region
      %48 = dma.done [#allocation3], 640
    $region25: #{predictor_forward.1} parent=1 // pred_fallthru
      _
    // Predicated region
    $region26: #{predictor_forward.1} parent=1 // pred_check
      _
    $region27: #{predictor_forward.1} parent=1 // pred_check_branch
      %50 = sbr.rel (0) target = $region29
    $region28: #{predictor_forward.1} parent=1 // pred_region
      %52 = dma.done [#allocation6], 2048
    $region29: #{predictor_forward.1} parent=1 // pred_fallthru
      _
    %v54 = vld [vmem:[%s0] sm:$0xf]
    %v55 = vld [vmem:[#allocation2] sm:$0xff]
    %v56 = vld [vmem:[#allocation2 + $0x8] sm:$0xff]
    %v57 = vld [vmem:[#allocation2 + $0x10] sm:$0xff]
    %v58 = vld [vmem:[#allocation2 + $0x18] sm:$0xff]
    %v59 = vld [vmem:[#allocation2 + $0x20] sm:$0x11]
    %v60 = vld [vmem:[%s2] sm:$0x3]
    %v62 = vperm.slane %v60, 0
    %v63 = vperm.slane %v60, 1
    %v71 = vunpack.c.l.b16 %v55
    %v72 = vunpack.c.h.b16 %v55
    %v73 = vunpack.c.l.b16 %v56
    %v74 = vunpack.c.h.b16 %v56
    %v75 = vunpack.c.l.b16 %v57
    %v76 = vunpack.c.h.b16 %v57
    %v77 = vunpack.c.l.b16 %v58
    %v78 = vunpack.c.h.b16 %v58
    %v79 = vunpack.c.l.b16 %v59
    %v80 = vunpack.c.h.b16 %v59
    %v81 = vpack.c.b16 %v73, %v71
    %v82 = vpack.c.b16 %v74, %v72
    %v83 = vpack.c.b16 %v77, %v75
    %v84 = vpack.c.b16 %v78, %v76
    %v85 = vpack.c.b16 %v79, %v79
    %v86 = vpack.c.b16 %v80, %v80
    %vm91 = vcmask 277504
    %v93 = vsel %vm91, %v54, 0
    %vm95 = vcmask 1040384
    %v97 = vsel %vm95, %v85, 0
    %v100 = vsel %vm95, %v86, 0
    %102 = vmatpush.bf16.msra.mxu0 0
    %103 = vmatpush.bf16.msra.mxu0 0
    %104 = vmatpush.bf16.msra.mxu0 0
    %105 = vmatpush.bf16.msra.mxu0 0
    %106 = vmatpush.bf16.msra.mxu0 0
    %107 = vmatpush.bf16.msra.mxu0 %v97
    %108 = vmatpush.bf16.msra.mxu0 %v83
    %109 = vmatpush.bf16.msra.mxu0 %v81
    %110 = vmatmul.bf16.gmra.mxu0 %v93
    %v111 = vpop.f32.mrf.mxu0
    %v112 = vadd.f32 %v62, %v111
    %v113 = vpop.f32.mrf.mxu0
    %114 = vdwg.mxu0
    %115 = vmatpush.bf16.msra.mxu0 0
    %116 = vmatpush.bf16.msra.mxu0 0
    %117 = vmatpush.bf16.msra.mxu0 0
    %118 = vmatpush.bf16.msra.mxu0 0
    %119 = vmatpush.bf16.msra.mxu0 0
    %120 = vmatpush.bf16.msra.mxu0 %v100
    %121 = vmatpush.bf16.msra.mxu0 %v84
    %122 = vmatpush.bf16.msra.mxu0 %v82
    %123 = vmatmul.bf16.gmra.mxu0 %v93
    %v124 = vpop.f32.mrf.mxu0
    %v125 = vadd.f32 %v63, %v124
    %v126 = vpop.f32.mrf.mxu0
    %127 = vdwg.mxu0
    %v128 = vmax.f32 %v112, 0.0
    %v129 = vmax.f32 %v125, 0.0
    %v130 = vpack.c.bf16 %v128, %v128
    %v131 = vpack.c.bf16 %v129, %v129
    %v132 = vld [vmem:[#allocation5] sm:$0xf]
    %v133 = vld [vmem:[#allocation5 + $0x4] sm:$0xf]
    %v134 = vld [vmem:[#allocation5 + $0x8] sm:$0xf]
    %v135 = vld [vmem:[#allocation5 + $0xc] sm:$0xf]
    %v136 = vld [vmem:[#allocation5 + $0x10] sm:$0xf]
    %v137 = vld [vmem:[#allocation5 + $0x14] sm:$0xf]
    %v138 = vld [vmem:[#allocation5 + $0x18] sm:$0xf]
    %v139 = vld [vmem:[#allocation5 + $0x1c] sm:$0xf]
    %v140 = vld [vmem:[#allocation5 + $0x20] sm:$0xf]
    %v141 = vld [vmem:[#allocation5 + $0x24] sm:$0xf]
    %v142 = vld [vmem:[#allocation5 + $0x28] sm:$0xf]
    %v143 = vld [vmem:[#allocation5 + $0x2c] sm:$0xf]
    %v144 = vld [vmem:[#allocation5 + $0x30] sm:$0xf]
    %v145 = vld [vmem:[#allocation5 + $0x34] sm:$0xf]
    %v146 = vld [vmem:[#allocation5 + $0x38] sm:$0xf]
    %v147 = vld [vmem:[#allocation5 + $0x3c] sm:$0xf]
    %v148 = vld [vmem:[#allocation5 + $0x40] sm:$0xf]
    %v149 = vld [vmem:[#allocation5 + $0x44] sm:$0xf]
    %v150 = vld [vmem:[#allocation5 + $0x48] sm:$0xf]
    %v151 = vld [vmem:[#allocation5 + $0x4c] sm:$0xf]
    %v152 = vld [vmem:[#allocation5 + $0x50] sm:$0xf]
    %v153 = vld [vmem:[#allocation5 + $0x54] sm:$0xf]
    %v154 = vld [vmem:[#allocation5 + $0x58] sm:$0xf]
    %v155 = vld [vmem:[#allocation5 + $0x5c] sm:$0xf]
    %v156 = vld [vmem:[#allocation5 + $0x60] sm:$0xf]
    %v157 = vld [vmem:[#allocation5 + $0x64] sm:$0xf]
    %v158 = vld [vmem:[#allocation5 + $0x68] sm:$0xf]
    %v159 = vld [vmem:[#allocation5 + $0x6c] sm:$0xf]
    %v160 = vld [vmem:[#allocation5 + $0x70] sm:$0xf]
    %v161 = vld [vmem:[#allocation5 + $0x74] sm:$0xf]
    %v162 = vld [vmem:[#allocation5 + $0x78] sm:$0xf]
    %v163 = vld [vmem:[#allocation5 + $0x7c] sm:$0xf]
    %v164 = vld [vmem:[%s4] sm:$0x1]
    %v166 = vperm.slane %v164, 0
    %v200 = vunpack.c.l.b16 %v132
    %v201 = vunpack.c.l.b16 %v133
    %v202 = vunpack.c.l.b16 %v134
    %v203 = vunpack.c.l.b16 %v135
    %v204 = vunpack.c.l.b16 %v136
    %v205 = vunpack.c.l.b16 %v137
    %v206 = vunpack.c.l.b16 %v138
    %v207 = vunpack.c.l.b16 %v139
    %v208 = vunpack.c.l.b16 %v140
    %v209 = vunpack.c.l.b16 %v141
    %v210 = vunpack.c.l.b16 %v142
    %v211 = vunpack.c.l.b16 %v143
    %v212 = vunpack.c.l.b16 %v144
    %v213 = vunpack.c.l.b16 %v145
    %v214 = vunpack.c.l.b16 %v146
    %v215 = vunpack.c.l.b16 %v147
    %v216 = vunpack.c.l.b16 %v148
    %v217 = vunpack.c.l.b16 %v149
    %v218 = vunpack.c.l.b16 %v150
    %v219 = vunpack.c.l.b16 %v151
    %v220 = vunpack.c.l.b16 %v152
    %v221 = vunpack.c.l.b16 %v153
    %v222 = vunpack.c.l.b16 %v154
    %v223 = vunpack.c.l.b16 %v155
    %v224 = vunpack.c.l.b16 %v156
    %v225 = vunpack.c.l.b16 %v157
    %v226 = vunpack.c.l.b16 %v158
    %v227 = vunpack.c.l.b16 %v159
    %v228 = vunpack.c.l.b16 %v160
    %v229 = vunpack.c.l.b16 %v161
    %v230 = vunpack.c.l.b16 %v162
    %v231 = vunpack.c.l.b16 %v163
    %v232 = vpack.c.b16 %v201, %v200
    %v233 = vpack.c.b16 %v203, %v202
    %v234 = vpack.c.b16 %v205, %v204
    %v235 = vpack.c.b16 %v207, %v206
    %v236 = vpack.c.b16 %v209, %v208
    %v237 = vpack.c.b16 %v211, %v210
    %v238 = vpack.c.b16 %v213, %v212
    %v239 = vpack.c.b16 %v215, %v214
    %v240 = vpack.c.b16 %v217, %v216
    %v241 = vpack.c.b16 %v219, %v218
    %v242 = vpack.c.b16 %v221, %v220
    %v243 = vpack.c.b16 %v223, %v222
    %v244 = vpack.c.b16 %v225, %v224
    %v245 = vpack.c.b16 %v227, %v226
    %v246 = vpack.c.b16 %v229, %v228
    %v247 = vpack.c.b16 %v231, %v230
    %264 = vmatpush.bf16.msra.mxu0 %v239
    %265 = vmatpush.bf16.msra.mxu0 %v238
    %266 = vmatpush.bf16.msra.mxu0 %v237
    %267 = vmatpush.bf16.msra.mxu0 %v236
    %268 = vmatpush.bf16.msra.mxu0 %v235
    %269 = vmatpush.bf16.msra.mxu0 %v234
    %270 = vmatpush.bf16.msra.mxu0 %v233
    %271 = vmatpush.bf16.msra.mxu0 %v232
    %272 = vmatmul.bf16.gmra.mxu0 %v130
    %v273 = vpop.f32.mrf.mxu0
    %v274 = vadd.f32 %v166, %v273
    %v275 = vpop.f32.mrf.mxu0
    %276 = vdwg.mxu0
    %277 = vmatpush.bf16.msra.mxu0 %v247
    %278 = vmatpush.bf16.msra.mxu0 %v246
    %279 = vmatpush.bf16.msra.mxu0 %v245
    %280 = vmatpush.bf16.msra.mxu0 %v244
    %281 = vmatpush.bf16.msra.mxu0 %v243
    %282 = vmatpush.bf16.msra.mxu0 %v242
    %283 = vmatpush.bf16.msra.mxu0 %v241
    %284 = vmatpush.bf16.msra.mxu0 %v240
    %285 = vmatmul.bf16.gmra.mxu0 %v131
    %v286 = vpop.f32.mrf.mxu0
    %v287 = vadd.f32 %v274, %v286
    %v288 = vpop.f32.mrf.mxu0
    %289 = vdwg.mxu0
    %290 = vst [vmem:[#allocation7] sm:$0xff] %v287
    // Predicated region
    $region30: #{predictor_forward.1} parent=1 // pred_check
      _
    $region31: #{predictor_forward.1} parent=1 // pred_check_branch
      %292 = sbr.rel (0) target = $region33
    $region32: #{predictor_forward.1} parent=1 // pred_region
      %294 = vsyncadd [#allocation4], 0
      %s296 = sshll.u32 [#allocation7], 4
      %s297 = int_to_ptr.vmem [resolvable:$true] %s296
      %s298 = sshll.u32 %s5, 4
      %s299 = int_to_ptr.hbm [resolvable:$true] %s298
      %301 = dma.vmem_to_hbm [thread:$0]  %s297, 128, %s299, [#allocation4]
    $region33: #{predictor_forward.1} parent=1 // pred_fallthru
      _
    // Predicated region
    $region34: #{predictor_forward.1} parent=1 // pred_check
      _
    $region35: #{predictor_forward.1} parent=1 // pred_check_branch
      %303 = sbr.rel (0) target = $region37
    $region36: #{predictor_forward.1} parent=1 // pred_region
      %305 = dma.done [#allocation4], 128
    $region37: #{predictor_forward.1} parent=1 // pred_fallthru
      _
    %306 = vsyncpa [#allocation3], 1
    %307 = vsyncpa [#allocation6], 1
    %308 = vsyncpa [#allocation4], 1

</llo_original>
